<compile_context>
chip_gen: v5e
topology: v5e:2x2
jax: 0.10.0
libtpu: 0.0.40
codegen_flags: <defaults>
</compile_context>

<pallas_src>
import math

import jax
import jax.numpy as jnp
from jax.experimental import pallas as pl
from jax.experimental.pallas import tpu as pltpu


_SMALL_OUTPUT_BYTES = 1 << 20        # below this, XLA's fused pad wins
_TARGET_OUT_BLOCK_BYTES = 4 << 20    # aim for ~4 MiB output block per grid step


def _pad_widths(target_shape, in_shape):
    assert len(target_shape) == len(in_shape)
    return tuple(
        (int(math.floor(abs(a - b) / 2)), int(math.ceil(abs(a - b) / 2)))
        for a, b in zip(target_shape, in_shape)
    )


def _vmem_budget_bytes():
    """Scoped VMEM budget with headroom; conservative if the query fails."""
    cap = None
    try:
        cap = getattr(pltpu.get_tpu_info(), "vmem_capacity_bytes", None)
    except Exception:
        cap = None
    if not cap:
        cap = 64 * 1024 * 1024  # conservative: v7x has 64 MiB VMEM per TensorCore
    return int(cap) * 3 // 4    # headroom for compiler-internal scratch


def _largest_divisor_at_most(n, cap):
    cap = int(max(1, min(cap, n)))
    for d in range(cap, 0, -1):
        if n % d == 0:
            return d
    return 1


def _choose_nc_block(nc, per_chan_in_bytes, per_chan_out_bytes, vmem_budget):
    per_chan = per_chan_in_bytes + per_chan_out_bytes
    max_by_vmem = vmem_budget // (2 * per_chan)          # double-buffered in+out
    max_by_target = _TARGET_OUT_BLOCK_BYTES // max(1, per_chan_out_bytes)
    blk = _largest_divisor_at_most(nc, min(max_by_vmem, max_by_target))
    # Keep >=2 grid steps when possible so v7x's two TensorCores both get work.
    if blk == nc and nc >= 2:
        blk = _largest_divisor_at_most(nc, nc // 2)
    return blk


def _build_hw_pad_call(nc, h_in, w_in, hw_pads, dtype, nc_blk, vmem_limit):
    """pallas_call padding the trailing (H, W) dims of a (NC, H, W) array."""
    (ph_lo, ph_hi), (pw_lo, pw_hi) = hw_pads
    h_out = h_in + ph_lo + ph_hi
    w_out = w_in + pw_lo + pw_hi

    def kernel(x_ref, o_ref):
        # Write-once strip stores: every output byte is stored exactly once and
        # no full (H_out, W_out) intermediate is materialized in registers.
        if ph_lo:
            o_ref[:, 0:ph_lo, :] = jnp.zeros((nc_blk, ph_lo, w_out), dtype)
        if ph_hi:
            o_ref[:, ph_lo + h_in:h_out, :] = jnp.zeros((nc_blk, ph_hi, w_out), dtype)
        if pw_lo:
            o_ref[:, ph_lo:ph_lo + h_in, 0:pw_lo] = jnp.zeros((nc_blk, h_in, pw_lo), dtype)
        if pw_hi:
            o_ref[:, ph_lo:ph_lo + h_in, pw_lo + w_in:w_out] = jnp.zeros(
                (nc_blk, h_in, pw_hi), dtype)
        o_ref[:, ph_lo:ph_lo + h_in, pw_lo:pw_lo + w_in] = x_ref[...]

    itemsize = jnp.dtype(dtype).itemsize
    bytes_accessed = (nc * h_in * w_in + nc * h_out * w_out) * itemsize

    return pl.pallas_call(
        kernel,
        out_shape=jax.ShapeDtypeStruct((nc, h_out, w_out), dtype),
        grid=(nc // nc_blk,),
        in_specs=[pl.BlockSpec((nc_blk, h_in, w_in), lambda i: (i, 0, 0))],
        out_specs=pl.BlockSpec((nc_blk, h_out, w_out), lambda i: (i, 0, 0)),
        compiler_params=pltpu.CompilerParams(
            dimension_semantics=("parallel",),
            vmem_limit_bytes=int(vmem_limit),
        ),
        # Pure data movement: give XLA the right byte traffic for scheduling.
        cost_estimate=pl.CostEstimate(
            flops=0, transcendentals=0, bytes_accessed=bytes_accessed),
    )


def constant_pad(img, target_shape, padding_mode="constant", *, force_kernel=False):
    """Pallas equivalent of ConstantPad(target_shape).forward(img)."""
    if padding_mode != "constant":
        # TODO(synk): only 'constant' (zero) fill is implemented; other np.pad
        #             modes (reflect/edge/...) have no kernel here.
        raise NotImplementedError("Only padding_mode='constant' is supported")
    assert len(target_shape) == len(img.shape)

    pads = _pad_widths(target_shape, img.shape)

    # Fast path: nothing to pad -> no kernel launch.
    if all(lo == 0 and hi == 0 for lo, hi in pads):
        return img

    itemsize = jnp.dtype(img.dtype).itemsize
    out_full = tuple(s + lo + hi for s, (lo, hi) in zip(img.shape, pads))
    out_bytes = int(math.prod(out_full)) * itemsize

    ndim = img.ndim
    if ndim == 1:
        hw_pads = ((0, 0), pads[0])
        lead_pads = ()
        h_in, w_in = 1, img.shape[0]
        nc = 1
    else:
        hw_pads = pads[-2:]
        lead_pads = pads[:-2]
        h_in, w_in = img.shape[-2], img.shape[-1]
        nc = int(math.prod(img.shape[:-2]))

    (ph_lo, ph_hi), (pw_lo, pw_hi) = hw_pads
    h_out = h_in + ph_lo + ph_hi
    w_out = w_in + pw_lo + pw_hi
    have_hw_pad = bool(ph_lo or ph_hi or pw_lo or pw_hi)

    # Fast paths: tiny outputs, or only leading-dim padding (pure zero-block
    # concat) -> XLA's fused pad beats a custom-call launch.
    if not have_hw_pad:
        return jnp.pad(img, pads, mode="constant")
    if not force_kernel and out_bytes < _SMALL_OUTPUT_BYTES:
        return jnp.pad(img, pads, mode="constant")

    per_chan_in = h_in * w_in * itemsize
    per_chan_out = h_out * w_out * itemsize
    vmem_budget = _vmem_budget_bytes()

    if 2 * (per_chan_in + per_chan_out) > vmem_budget:
        # TODO(synk): tile H (pad rows on block edges) for planes that do not
        #             fit VMEM instead of bailing out to XLA's pad.
        return jnp.pad(img, pads, mode="constant")

    nc_blk = _choose_nc_block(nc, per_chan_in, per_chan_out, vmem_budget)

    x3 = img.reshape(nc, h_in, w_in)
    padded3 = _build_hw_pad_call(
        nc, h_in, w_in, hw_pads, img.dtype, nc_blk, vmem_budget)(x3)

    if ndim == 1:
        return padded3.reshape(w_out)

    out = padded3.reshape(tuple(img.shape[:-2]) + (h_out, w_out))
    if any(lo or hi for lo, hi in lead_pads):
        # Leading-dim (N/C/...) zeros are produced outside the kernel: no HBM
        # reads are wasted fetching input blocks that would be discarded.
        out = jnp.pad(out, lead_pads + ((0, 0), (0, 0)), mode="constant")
    return out


if __name__ == "__main__":
    key = jax.random.PRNGKey(0)

    # Main case from the reference module: N=2, C=4, H=16->20, W=16->24.
    x = jax.random.normal(key, (2, 4, 16, 16), dtype=jnp.float32)
    tgt = (2, 4, 20, 24)
    out = jax.block_until_ready(constant_pad(x, tgt, force_kernel=True))
    ref = jnp.pad(x, _pad_widths(tgt, x.shape), mode="constant")
    assert out.shape == ref.shape and out.dtype == ref.dtype
    assert bool(jnp.array_equal(out, ref)), "mismatch (f32, H/W pad)"

    # Padding along N as well: leading-dim zeros come from XLA, kernel only
    # touches real input slabs.
    tgt2 = (4, 4, 20, 24)
    out2 = jax.block_until_ready(constant_pad(x, tgt2, force_kernel=True))
    ref2 = jnp.pad(x, _pad_widths(tgt2, x.shape), mode="constant")
    assert out2.shape == ref2.shape
    assert bool(jnp.array_equal(out2, ref2)), "mismatch (f32, N/H/W pad)"

    # Sub-32-bit dtype (packed-sublane layout path).
    xb = x.astype(jnp.bfloat16)
    outb = jax.block_until_ready(constant_pad(xb, tgt, force_kernel=True))
    refb = jnp.pad(xb, _pad_widths(tgt, xb.shape), mode="constant")
    assert outb.dtype == refb.dtype
    assert bool(jnp.array_equal(outb, refb)), "mismatch (bf16, H/W pad)"

    # Larger input: exercises NC-folded blocks (many channels per grid step,
    # >=2 parallel grid steps) and skips the small-input fast path naturally.
    xl = jax.random.normal(key, (2, 32, 64, 128), dtype=jnp.float32)
    tgtl = (2, 32, 72, 160)
    outl = jax.block_until_ready(constant_pad(xl, tgtl))
    refl = jnp.pad(xl, _pad_widths(tgtl, xl.shape), mode="constant")
    assert bool(jnp.array_equal(outl, refl)), "mismatch (f32, large H/W pad)"

    print("KERNEL_OK")
</pallas_src>

<mosaic_0001>
module attributes {stable_mosaic.version = 11 : i64} {
  func.func @kernel(%arg0: i32, %arg1: memref<4x16x16xf32, #tpu.memory_space<vmem>>, %arg2: memref<4x20x24xf32, #tpu.memory_space<vmem>>) attributes {dimension_semantics = [#tpu.dimension_semantics<parallel>], iteration_bounds = array<i64: 2>, scalar_prefetch = 0 : i64, scratch_operands = 0 : i64, tpu.core_type = #tpu.core_type<tc>, window_params = [{transform_indices = @transform_0, window_bounds = array<i64: 4, 16, 16>}, {transform_indices = @transform_1, window_bounds = array<i64: 4, 20, 24>}]} {
    %cst = arith.constant 0.000000e+00 : f32
    %0 = vector.broadcast %cst : f32 to vector<4x2x24xf32>
    %c0 = arith.constant 0 : index
    %c0_0 = arith.constant 0 : index
    %c0_1 = arith.constant 0 : index
    %1 = vector.load %arg2[%c0, %c0_0, %c0_1] : memref<4x20x24xf32, #tpu.memory_space<vmem>>, vector<4x2x24xf32>
    tpu.vector_store %arg2[%c0, %c0_0, %c0_1], %0 {strides = array<i32>} : memref<4x20x24xf32, #tpu.memory_space<vmem>>, vector<4x2x24xf32>,
    %cst_2 = arith.constant 0.000000e+00 : f32
    %2 = vector.broadcast %cst_2 : f32 to vector<4x2x24xf32>
    %c0_3 = arith.constant 0 : index
    %c18 = arith.constant 18 : index
    %c0_4 = arith.constant 0 : index
    %3 = vector.load %arg2[%c0_3, %c18, %c0_4] : memref<4x20x24xf32, #tpu.memory_space<vmem>>, vector<4x2x24xf32>
    tpu.vector_store %arg2[%c0_3, %c18, %c0_4], %2 {strides = array<i32>} : memref<4x20x24xf32, #tpu.memory_space<vmem>>, vector<4x2x24xf32>,
    %cst_5 = arith.constant 0.000000e+00 : f32
    %4 = vector.broadcast %cst_5 : f32 to vector<4x16x4xf32>
    %c0_6 = arith.constant 0 : index
    %c2 = arith.constant 2 : index
    %c0_7 = arith.constant 0 : index
    %5 = vector.load %arg2[%c0_6, %c2, %c0_7] : memref<4x20x24xf32, #tpu.memory_space<vmem>>, vector<4x16x4xf32>
    tpu.vector_store %arg2[%c0_6, %c2, %c0_7], %4 {strides = array<i32>} : memref<4x20x24xf32, #tpu.memory_space<vmem>>, vector<4x16x4xf32>,
    %cst_8 = arith.constant 0.000000e+00 : f32
    %6 = vector.broadcast %cst_8 : f32 to vector<4x16x4xf32>
    %c0_9 = arith.constant 0 : index
    %c2_10 = arith.constant 2 : index
    %c20 = arith.constant 20 : index
    %7 = vector.load %arg2[%c0_9, %c2_10, %c20] : memref<4x20x24xf32, #tpu.memory_space<vmem>>, vector<4x16x4xf32>
    tpu.vector_store %arg2[%c0_9, %c2_10, %c20], %6 {strides = array<i32>} : memref<4x20x24xf32, #tpu.memory_space<vmem>>, vector<4x16x4xf32>,
    %c0_11 = arith.constant 0 : index
    %c0_12 = arith.constant 0 : index
    %c0_13 = arith.constant 0 : index
    %8 = vector.load %arg1[%c0_11, %c0_12, %c0_13] : memref<4x16x16xf32, #tpu.memory_space<vmem>>, vector<4x16x16xf32>
    %c0_14 = arith.constant 0 : index
    %c2_15 = arith.constant 2 : index
    %c4 = arith.constant 4 : index
    %9 = vector.load %arg2[%c0_14, %c2_15, %c4] : memref<4x20x24xf32, #tpu.memory_space<vmem>>, vector<4x16x16xf32>
    tpu.vector_store %arg2[%c0_14, %c2_15, %c4], %8 {strides = array<i32>} : memref<4x20x24xf32, #tpu.memory_space<vmem>>, vector<4x16x16xf32>,
    return
  }
  func.func @transform_0(%arg0: i32) -> (i32, i32, i32) {
    %c0_i32 = arith.constant 0 : i32
    %c0_i32_0 = arith.constant 0 : i32
    %c0_i32_1 = arith.constant 0 : i32
    return %arg0, %c0_i32, %c0_i32_0 : i32, i32, i32
  }
  func.func @transform_1(%arg0: i32) -> (i32, i32, i32) {
    %c0_i32 = arith.constant 0 : i32
    %c0_i32_0 = arith.constant 0 : i32
    %c0_i32_1 = arith.constant 0 : i32
    return %arg0, %c0_i32, %c0_i32_0 : i32, i32, i32
  }
}

</mosaic_0001>

<llo_original>
// kernel: tpu_custom_call.1
$region0: #{tpu_custom_call.1}
  #allocation0 [shape = 'u32[]', space=smem, size = 0x4, offset = 0x4, fixed_abs, tag = 'smem constant byte address 0x4 - core index']
  #allocation1 [shape = 'u32[72,128]{1,0:T(1,128)}', space=vmem, size = 0x9000, scoped, tag = 'internal scratch']
  %s0 = inlined_call_operand.hbm [shape: f32[8,16,16], index: 0, kind: input, shape index: {}]
  %s1 = inlined_call_operand.vmem [shape: f32[8,20,24], index: 1, kind: output, shape index: {}]
  %s2 = sld [smem:[#allocation0]]
  $region41: #{tpu_custom_call.1} parent=0
    _
  %s4 = ssub.s32 1, %s2
  %s5 = scalar_select 0, %s4, %s2
  $region1: #{tpu_custom_call.1} parent=0
    #allocation2 [shape = 'u8[65536]{0}', space=vmem, size = 0x10000, scoped, tag = 'input window, operand 0']
    #allocation3 [shape = 's32[2]{0}', space=sflag, size = 0x8, scoped, tag = 'scoped memory for tpu_custom_call.1']
    %6 = vsyncpa [#allocation3], 0
    %s7 = scalar_lea.sflag [#allocation3], 1
    %8 = vsyncpa %s7, 0
    loop: start=0, step=1, limit=4
    $region2: #{tpu_custom_call.1} parent=1 // loop_pre_header
      _
    $region3: #{tpu_custom_call.1} parent=1 // loop_header
      %s10 = sphi 0, %s14
      %p11 = scmp.ge.s32.totalorder %s10, 4
      %s20 = sphi 0, %s22
      %s23 = sphi 0, %s20
      %s24 = sphi 0, %s23
      %s40 = sphi 0, %s24
      %s46 = sphi 0, %s48
      %s49 = sphi 0, %s46
      %s50 = sphi 0, %s49
      %s66 = sphi 0, %s50
    $region4: #{tpu_custom_call.1} parent=1 // loop_header_branch
      %13 = sbr.rel (%p11) target = $region8
    $region5: #{tpu_custom_call.1} parent=1 // loop_body
      %s15 = ssub.s32 %s10, 1
      %s16 = ssub.s32 %s10, 2
      %s17 = sadd.s32 %s10, 1
      %s18 = ssub.s32 %s10, %s17
      %p19 = scmp.eq.s32.totalorder %s18, 0
      %s21 = sadd.s32 %s20, 1
      %s22 = scalar_select %p19, %s20, %s21
      %p25 = pneg %p19
      %p26 = scmp.eq.s32.totalorder %s10, 1
      %p27 = por %p25, %p26
      %p28 = scmp.ne.s32.totalorder %s20, %s23
      %p29 = scmp.eq.s32.totalorder %s10, 0
      %p30 = por %p28, %p29
      %p31 = scmp.ne.s32.totalorder %s20, %s23
      %p32 = scmp.eq.s32.totalorder %s15, 1
      %p33 = por %p31, %p32
      %p34 = scmp.ne.s32.totalorder %s23, %s24
      %p35 = scmp.eq.s32.totalorder %s15, 0
      %p36 = por %p34, %p35
      %p37 = scmp.ne.s32.totalorder %s23, %s24
      %p38 = scmp.eq.s32.totalorder %s16, 1
      %p39 = por %p37, %p38
      %p41 = scmp.ne.s32.totalorder %s24, %s40
      %p42 = scmp.eq.s32.totalorder %s16, 0
      %p43 = por %p41, %p42
      %s44 = ssub.s32 %s10, %s17
      %p45 = scmp.eq.s32.totalorder %s44, 0
      %s47 = sadd.s32 %s46, 1
      %s48 = scalar_select %p45, %s46, %s47
      %p51 = pneg %p45
      %p52 = scmp.eq.s32.totalorder %s10, 1
      %p53 = por %p51, %p52
      %p54 = scmp.ne.s32.totalorder %s46, %s49
      %p55 = scmp.eq.s32.totalorder %s10, 0
      %p56 = por %p54, %p55
      %p57 = scmp.ne.s32.totalorder %s46, %s49
      %p58 = scmp.eq.s32.totalorder %s15, 1
      %p59 = por %p57, %p58
      %p60 = scmp.ne.s32.totalorder %s49, %s50
      %p61 = scmp.eq.s32.totalorder %s15, 0
      %p62 = por %p60, %p61
      %p63 = scmp.ne.s32.totalorder %s49, %s50
      %p64 = scmp.eq.s32.totalorder %s16, 1
      %p65 = por %p63, %p64
      %p67 = scmp.ne.s32.totalorder %s50, %s66
      %p68 = scmp.eq.s32.totalorder %s16, 0
      %p69 = por %p67, %p68
      %p70 = scmp.le.s32.totalorder 1, %s10
      %p71 = scmp.lt.s32.totalorder %s10, 3
      %p72 = pnand %p70, %p71
      %p73 = pneg %p72
      // Predicated region
      $region9: #{tpu_custom_call.1} parent=5 // pred_check
        _
      $region10: #{tpu_custom_call.1} parent=5 // pred_check_branch
        %75 = sbr.rel (%p72) target = $region12
      $region11: #{tpu_custom_call.1} parent=5 // pred_region
        %s76 = ssub.s32 %s10, 1
      $region12: #{tpu_custom_call.1} parent=5 // pred_fallthru
        _
      %p77 = scmp.lt.s32.totalorder %s10, 2
      // Predicated region
      $region13: #{tpu_custom_call.1} parent=5 // pred_check
        %p78 = pneg %p77
      $region14: #{tpu_custom_call.1} parent=5 // pred_check_branch
        %80 = sbr.rel (%p78) target = $region16
      $region15: #{tpu_custom_call.1} parent=5 // pred_region
        // Predicated region
        $region17: #{tpu_custom_call.1} parent=15 // pred_check
          %p81 = pneg %p30
        $region18: #{tpu_custom_call.1} parent=15 // pred_check_branch
          %83 = sbr.rel (%p81) target = $region20
        $region19: #{tpu_custom_call.1} parent=15 // pred_region
          %s84 = sand.u32 %s20, 1
          %s85 = scalar_lea.sflag [#allocation3], %s84
          %s86 = sand.u32 %s20, 1
          %s87 = smul.addr %s86, 64
          %s88 = scalar_lea.vmem [#allocation2], %s87
          %s89 = smul.u32 4, %s10
          %91 = vsyncadd %s85, 0
          %s92 = smul.addr %s89, 2
          %s93 = smul.addr %s92, 8
          %s94 = scalar_lea.hbm %s0, %s93
          %s95 = sshll.u32 %s94, 4
          %s96 = int_to_ptr.hbm [resolvable:$true] %s95
          %s97 = sshll.u32 %s88, 4
          %s98 = int_to_ptr.vmem [resolvable:$true] %s97
          %103 = dma.hbm_to_vmem [thread:$0]  %s96, 1024, %s98, %s85, 128, 128, 8
        $region20: #{tpu_custom_call.1} parent=15 // pred_fallthru
          _
      $region16: #{tpu_custom_call.1} parent=5 // pred_fallthru
        _
      %p104 = scmp.le.s32.totalorder 1, %s10
      %p105 = scmp.lt.s32.totalorder %s10, 3
      %p106 = pnand %p104, %p105
      %p107 = pneg %p106
      // Predicated region
      $region21: #{tpu_custom_call.1} parent=5 // pred_check
        _
      $region22: #{tpu_custom_call.1} parent=5 // pred_check_branch
        %109 = sbr.rel (%p106) target = $region24
      $region23: #{tpu_custom_call.1} parent=5 // pred_region
        %s110 = ssub.s32 %s10, 1
        %s111 = sand.u32 %s23, 1
        %s112 = scalar_lea.sflag [#allocation3], %s111
        %s113 = sand.u32 %s23, 1
        %s114 = smul.addr %s113, 64
        %s115 = scalar_lea.vmem [#allocation2], %s114
        // Predicated region
        $region25: #{tpu_custom_call.1} parent=23 // pred_check
          %p116 = pneg %p36
        $region26: #{tpu_custom_call.1} parent=23 // pred_check_branch
          %118 = sbr.rel (%p116) target = $region28
        $region27: #{tpu_custom_call.1} parent=23 // pred_region
          %120 = dma.done %s112, 1024
        $region28: #{tpu_custom_call.1} parent=23 // pred_fallthru
          _
        %s121 = sand.u32 %s23, 1
        %s122 = scalar_lea.sflag [#allocation3], %s121
        %s123 = sand.u32 %s23, 1
        %s124 = smul.addr %s123, 64
        %s125 = scalar_lea.vmem [#allocation2], %s124
        %p126 = pneg %p36
        %p127 = pneg %p33
        %p128 = pneg %p62
        %p129 = pneg %p59
        %s130 = smul.u32 4, %s15
        %p131 = scmp.lt.s32.totalorder %s130, 7
        %s132 = scalar_select %p131, %s130, 7
        %s133 = smul.addr %s132, 3
        %s134 = smul.addr %s133, 8
        %s135 = scalar_lea.vmem %s1, %s134
        %s136 = smul.u32 4, %s15
        %s137 = smul.u32 4, %s15
        %p138 = scmp.lt.s32.totalorder %s137, 7
        %s139 = scalar_select %p138, %s137, 7
        %s140 = smul.addr %s139, 3
        %s141 = smul.addr %s140, 8
        %s142 = scalar_lea.vmem %s1, %s141
        %s143 = smul.u32 4, %s15
        %vm144 = vcmask 189440
        %145 = vst.msk [vmem:[%s142] sm:$0x3] %vm144, 0.0
        %146 = vst.msk [vmem:[%s142 + $0x18] sm:$0x3] %vm144, 0.0
        %147 = vst.msk [vmem:[%s142 + $0x30] sm:$0x3] %vm144, 0.0
        %148 = vst.msk [vmem:[%s142 + $0x48] sm:$0x3] %vm144, 0.0
        %149 = vst.msk [vmem:[%s142 + $0x12] sm:$0x3] %vm144, 0.0
        %150 = vst.msk [vmem:[%s142 + $0x2a] sm:$0x3] %vm144, 0.0
        %151 = vst.msk [vmem:[%s142 + $0x42] sm:$0x3] %vm144, 0.0
        %152 = vst.msk [vmem:[%s142 + $0x5a] sm:$0x3] %vm144, 0.0
        %vm153 = vcmask 31744
        %154 = vst.msk [vmem:[%s142 + $0x2] sm:$0xff] %vm153, 0.0
        %155 = vst.msk [vmem:[%s142 + $0xa] sm:$0xff] %vm153, 0.0
        %156 = vst.msk [vmem:[%s142 + $0x1a] sm:$0xff] %vm153, 0.0
        %157 = vst.msk [vmem:[%s142 + $0x22] sm:$0xff] %vm153, 0.0
        %158 = vst.msk [vmem:[%s142 + $0x32] sm:$0xff] %vm153, 0.0
        %159 = vst.msk [vmem:[%s142 + $0x3a] sm:$0xff] %vm153, 0.0
        %160 = vst.msk [vmem:[%s142 + $0x4a] sm:$0xff] %vm153, 0.0
        %161 = vst.msk [vmem:[%s142 + $0x52] sm:$0xff] %vm153, 0.0
        %vm162 = vcmask 195744
        %163 = vst.msk [vmem:[%s142 + $0x2] sm:$0xff] %vm162, 0.0
        %164 = vst.msk [vmem:[%s142 + $0xa] sm:$0xff] %vm162, 0.0
        %165 = vst.msk [vmem:[%s142 + $0x1a] sm:$0xff] %vm162, 0.0
        %166 = vst.msk [vmem:[%s142 + $0x22] sm:$0xff] %vm162, 0.0
        %167 = vst.msk [vmem:[%s142 + $0x32] sm:$0xff] %vm162, 0.0
        %168 = vst.msk [vmem:[%s142 + $0x3a] sm:$0xff] %vm162, 0.0
        %169 = vst.msk [vmem:[%s142 + $0x4a] sm:$0xff] %vm162, 0.0
        %170 = vst.msk [vmem:[%s142 + $0x52] sm:$0xff] %vm162, 0.0
        %v171 = vld [vmem:[%s115] sm:$0xff]
        %v172 = vld [vmem:[%s115 + $0x8] sm:$0xff]
        %v173 = vld [vmem:[%s115 + $0x10] sm:$0xff]
        %v174 = vld [vmem:[%s115 + $0x18] sm:$0xff]
        %v175 = vld [vmem:[%s115 + $0x20] sm:$0xff]
        %v176 = vld [vmem:[%s115 + $0x28] sm:$0xff]
        %v177 = vld [vmem:[%s115 + $0x30] sm:$0xff]
        %v178 = vld [vmem:[%s115 + $0x38] sm:$0xff]
        %187 = vrot.lane.b32.xlu0 %v171, 4
        %v188 = vpop.permute.xlu0 %187
        %189 = vrot.lane.b32.xlu0 %v172, 4
        %v190 = vpop.permute.xlu0 %189
        %191 = vrot.lane.b32.xlu0 %v173, 4
        %v192 = vpop.permute.xlu0 %191
        %193 = vrot.lane.b32.xlu0 %v174, 4
        %v194 = vpop.permute.xlu0 %193
        %195 = vrot.lane.b32.xlu0 %v175, 4
        %v196 = vpop.permute.xlu0 %195
        %197 = vrot.lane.b32.xlu0 %v176, 4
        %v198 = vpop.permute.xlu0 %197
        %199 = vrot.lane.b32.xlu0 %v177, 4
        %v200 = vpop.permute.xlu0 %199
        %201 = vrot.lane.b32.xlu0 %v178, 4
        %v202 = vpop.permute.xlu0 %201
        %vm211 = vcmask 162848
        %212 = vst.msk [vmem:[%s142 + $0x2] sm:$0xff] %vm211, %v188
        %213 = vst.msk [vmem:[%s142 + $0xa] sm:$0xff] %vm211, %v190
        %214 = vst.msk [vmem:[%s142 + $0x1a] sm:$0xff] %vm211, %v192
        %215 = vst.msk [vmem:[%s142 + $0x22] sm:$0xff] %vm211, %v194
        %216 = vst.msk [vmem:[%s142 + $0x32] sm:$0xff] %vm211, %v196
        %217 = vst.msk [vmem:[%s142 + $0x3a] sm:$0xff] %vm211, %v198
        %218 = vst.msk [vmem:[%s142 + $0x4a] sm:$0xff] %vm211, %v200
        %219 = vst.msk [vmem:[%s142 + $0x52] sm:$0xff] %vm211, %v202
        %s220 = smul.u32 4, %s15
        %p221 = scmp.lt.s32.totalorder %s220, 7
        %s222 = scalar_select %p221, %s220, 7
        %s223 = smul.addr %s222, 3
        %s224 = smul.addr %s223, 8
        %s225 = scalar_lea.vmem %s1, %s224
        // Predicated region
        $region29: #{tpu_custom_call.1} parent=23 // pred_check
          %p226 = pneg %p59
        $region30: #{tpu_custom_call.1} parent=23 // pred_check_branch
          %228 = sbr.rel (%p226) target = $region32
        $region31: #{tpu_custom_call.1} parent=23 // pred_region
          %s229 = smul.u32 4, %s15
        $region32: #{tpu_custom_call.1} parent=23 // pred_fallthru
          _
      $region24: #{tpu_custom_call.1} parent=5 // pred_fallthru
        _
      %p230 = scmp.le.s32.totalorder 2, %s10
      // Predicated region
      $region33: #{tpu_custom_call.1} parent=5 // pred_check
        %p231 = pneg %p230
      $region34: #{tpu_custom_call.1} parent=5 // pred_check_branch
        %233 = sbr.rel (%p231) target = $region36
      $region35: #{tpu_custom_call.1} parent=5 // pred_region
        %s234 = ssub.s32 %s10, 2
        // Predicated region
        $region37: #{tpu_custom_call.1} parent=35 // pred_check
          %p235 = pneg %p65
        $region38: #{tpu_custom_call.1} parent=35 // pred_check_branch
          %237 = sbr.rel (%p235) target = $region40
        $region39: #{tpu_custom_call.1} parent=35 // pred_region
          %s238 = smul.u32 4, %s16
          %p239 = scmp.lt.s32.totalorder %s238, 7
          %s240 = scalar_select %p239, %s238, 7
          %s241 = smul.addr %s240, 3
          %s242 = smul.addr %s241, 8
          %s243 = scalar_lea.vmem %s1, %s242
        $region40: #{tpu_custom_call.1} parent=35 // pred_fallthru
          _
      $region36: #{tpu_custom_call.1} parent=5 // pred_fallthru
        _
    $region6: #{tpu_custom_call.1} parent=1 // loop_footer
      %s14 = sadd.s32 1, %s10
    $region7: #{tpu_custom_call.1} parent=1 // loop_footer_branch
      %9 = sbr.rel target = $region3
    $region8: #{tpu_custom_call.1} parent=1 // loop_exit
      _
    %244 = vsyncpa [#allocation3], 1
    %s245 = scalar_lea.sflag [#allocation3], 1
    %246 = vsyncpa %s245, 1

</llo_original>
